<compile_context>
chip_gen: v5e
topology: v5e:2x2
jax: 0.10.0
libtpu: 0.0.40
codegen_flags: <defaults>
</compile_context>

<pallas_src>
import math
from functools import partial

import jax
import jax.numpy as jnp
from jax import lax
from jax.experimental import pallas as pl
from jax.experimental.pallas import tpu as pltpu

INF = 1e20
VERY_SMALL_NUMBER = 1e-12


def graph_learner_kernel(ctx_ref, noise_ref, fmask_ref, w_ref,
                         xout_ref, adj_ref, *, num_pers, epsilon):
    """Processes Bb graphs per grid step.

    ctx_ref   : (Bb, N, D) f32  node features
    noise_ref : (Bb, N, D) f32  standard-normal noise for mask_feature
    fmask_ref : (1, D)     f32  feat_mask parameter (pre-sigmoid)
    w_ref     : (D, P*H)   bf16 fused, pre-transposed Linear weights
    xout_ref  : (Bb, N, D) f32  masked features
    adj_ref   : (Bb, N, N) f32  learned adjacency
    """
    x = ctx_ref[...]                                  # (Bb, N, D)
    eps = noise_ref[...]                              # (Bb, N, D)
    m = jax.nn.sigmoid(fmask_ref[...])                # (1, D) -> broadcasts

    # --- mask_feature (use_sigmoid=True, marginalize=True), fused form:
    #     z = -x + 0.5*eps ; xm = x + z*(1-m)  ==  m*x + 0.5*(1-m)*eps
    coef = 0.5 * (1.0 - m)                            # (1, D)
    xm = x * m + eps * coef                           # (Bb, N, D) f32
    xout_ref[...] = xm

    bb, n, d = x.shape
    ph = w_ref.shape[1]

    # --- learn_adj, metric_type == 'attention' (all perspectives fused) ---
    # One wide matmul over all Bb*N rows (weights shared across graphs).
    xm_flat = xm.reshape(bb * n, d).astype(jnp.bfloat16)
    fc = jnp.maximum(
        jnp.dot(xm_flat, w_ref[...], preferred_element_type=jnp.float32),
        0.0)                                          # (Bb*N, P*H) f32
    fc = fc.reshape(bb, n, ph).astype(jnp.bfloat16)

    # Per-graph Gram: contract the fused hidden dim, batch over Bb.
    # FC.FC^T == sum_p fc_p.fc_p^T because relu is elementwise.
    att = lax.dot_general(
        fc, fc,
        dimension_numbers=(((2,), (2,)), ((0,), (0,))),
        preferred_element_type=jnp.float32)           # (Bb, N, N) f32
    att = att * (1.0 / num_pers)
    markoff_value = -INF

    # --- graph_type == 'epsilonNN' ---
    att = jax.nn.sigmoid(att)
    att = jnp.where(att > epsilon, att, markoff_value)

    # --- metric_type in ('transformer','attention','gat_attention') => softmax
    # (row-max kept: exact torch.softmax numerics, robust for any epsilon)
    row_max = jnp.max(att, axis=-1, keepdims=True)
    e = jnp.exp(att - row_max)
    denom = jnp.sum(e, axis=-1, keepdims=True)
    adj_ref[...] = (e * pl.reciprocal(denom, approx=True)).astype(adj_ref.dtype)


def _pick_block_batch(batch, n, target_rows=256):
    """Largest divisor of `batch` with bb*n <= target_rows, while keeping the
    grid at >= 2 steps when batch >= 2 (so both v7x TensorCores get work)."""
    cap = max(1, target_rows // max(n, 1))
    if batch >= 2:
        cap = min(cap, batch // 2)
    cap = max(1, min(cap, batch))
    bb = 1
    for cand in range(1, cap + 1):
        if batch % cand == 0:
            bb = cand
    return bb


def graph_learner_forward(x, noise, feat_mask, weights, *, epsilon):
    """x: (B,N,D) f32, noise: (B,N,D) f32, feat_mask: (D,), weights: (P,H,D)."""
    B, N, D = x.shape
    P, H, _ = weights.shape
    PH = P * H

    # Fuse + pre-transpose weights: (P,H,D) -> (D, P*H), cast to bf16 for the MXU.
    w_all = jnp.transpose(weights, (2, 0, 1)).reshape(D, PH).astype(jnp.bfloat16)

    Bb = _pick_block_batch(B, N)
    grid = (B // Bb,)

    kernel = partial(graph_learner_kernel, num_pers=P, epsilon=epsilon)

    out_shape = (
        jax.ShapeDtypeStruct((B, N, D), jnp.float32),   # masked_features
        jax.ShapeDtypeStruct((B, N, N), jnp.float32),   # learned_adj
    )

    return pl.pallas_call(
        kernel,
        out_shape=out_shape,
        grid_spec=pltpu.PrefetchScalarGridSpec(
            num_scalar_prefetch=0,
            grid=grid,
            in_specs=[
                pl.BlockSpec((Bb, N, D), lambda b: (b, 0, 0)),   # context
                pl.BlockSpec((Bb, N, D), lambda b: (b, 0, 0)),   # noise
                pl.BlockSpec((1, D),     lambda b: (0, 0)),      # feat_mask
                pl.BlockSpec((D, PH),    lambda b: (0, 0)),      # fused weights
            ],
            out_specs=[
                pl.BlockSpec((Bb, N, D), lambda b: (b, 0, 0)),
                pl.BlockSpec((Bb, N, N), lambda b: (b, 0, 0)),
            ],
        ),
        compiler_params=pltpu.CompilerParams(
            dimension_semantics=("parallel",),
            # Explicit scoped-VMEM budget: tiny blocks here, but keep it well
            # under v7x's 64 MiB physical VMEM (fine on v5e/v6e's 128 MiB).
            vmem_limit_bytes=32 * 1024 * 1024,
        ),
    )(x, noise, feat_mask.reshape(1, D), w_all)


def graph_learner_reference(x, noise, feat_mask, weights, *, epsilon):
    """Pure-JAX reference with the same bf16 matmul casts as the kernel."""
    P, H, D = weights.shape
    m = jax.nn.sigmoid(feat_mask)[None, None, :]
    xm = x * m + 0.5 * (1.0 - m) * noise
    w_all = jnp.transpose(weights, (2, 0, 1)).reshape(D, P * H).astype(jnp.bfloat16)
    fc = jnp.maximum(
        jnp.einsum('bnd,dh->bnh', xm.astype(jnp.bfloat16), w_all,
                   preferred_element_type=jnp.float32), 0.0)
    fcb = fc.astype(jnp.bfloat16)
    att = jnp.einsum('bnh,bmh->bnm', fcb, fcb,
                     preferred_element_type=jnp.float32) / P
    att = jax.nn.sigmoid(att)
    att = jnp.where(att > epsilon, att, -INF)
    return xm, jax.nn.softmax(att, axis=-1)


if __name__ == "__main__":
    # Small shapes consistent with the module: batch=8, ctx_size(N)=8,
    # input_size=32, hidden_size=32, num_pers=2, epsilon=0.3.
    B, N, D, H, P = 8, 8, 32, 32, 2
    EPSILON = 0.3

    key = jax.random.PRNGKey(0)
    k_x, k_w, k_noise = jax.random.split(key, 3)

    x = jax.random.normal(k_x, (B, N, D), dtype=jnp.float32)

    # nn.Linear(input_size, hidden_size, bias=False) weights, one per perspective
    # (deterministic uniform(-1/sqrt(D), 1/sqrt(D)), Linear default fan-in bound).
    bound = 1.0 / math.sqrt(D)
    weights = jax.random.uniform(k_w, (P, H, D), dtype=jnp.float32,
                                 minval=-bound, maxval=bound)

    # construct_feat_mask(..., init_strategy='constant') -> zeros
    feat_mask = jnp.zeros((D,), dtype=jnp.float32)

    # Standard-normal noise consumed by mask_feature (torch.normal equivalent).
    noise = jax.random.normal(k_noise, (B, N, D), dtype=jnp.float32)

    masked_features, learned_adj = graph_learner_forward(
        x, noise, feat_mask, weights, epsilon=EPSILON)
    jax.block_until_ready((masked_features, learned_adj))

    assert masked_features.shape == (B, N, D)
    assert learned_adj.shape == (B, N, N)

    # Correctness vs. pure-JAX reference (same bf16 matmul casts).
    ref_xm, ref_adj = graph_learner_reference(
        x, noise, feat_mask, weights, epsilon=EPSILON)
    assert jnp.allclose(masked_features, ref_xm, atol=1e-5, rtol=1e-5)
    assert jnp.allclose(learned_adj, ref_adj, atol=1e-2, rtol=1e-2)
    # softmax rows should sum to ~1 (approx reciprocal -> loose tolerance)
    assert jnp.allclose(jnp.sum(learned_adj, axis=-1), 1.0, atol=1e-2)

    print("KERNEL_OK")
</pallas_src>

<mosaic_0001>
module attributes {stable_mosaic.version = 11 : i64} {
  func.func @graph_learner_kernel(%arg0: i32, %arg1: memref<4x8x32xf32, #tpu.memory_space<vmem>>, %arg2: memref<4x8x32xf32, #tpu.memory_space<vmem>>, %arg3: memref<1x32xf32, #tpu.memory_space<vmem>>, %arg4: memref<32x64xbf16, #tpu.memory_space<vmem>>, %arg5: memref<4x8x32xf32, #tpu.memory_space<vmem>>, %arg6: memref<4x8x8xf32, #tpu.memory_space<vmem>>) attributes {dimension_semantics = [#tpu.dimension_semantics<parallel>], iteration_bounds = array<i64: 2>, scalar_prefetch = 0 : i64, scratch_operands = 0 : i64, tpu.core_type = #tpu.core_type<tc>, window_params = [{transform_indices = @transform_0, window_bounds = array<i64: 4, 8, 32>}, {transform_indices = @transform_1, window_bounds = array<i64: 4, 8, 32>}, {pipeline_mode = #tpu.pipeline_mode<synchronous>, transform_indices = @transform_2, window_bounds = array<i64: 1, 32>}, {pipeline_mode = #tpu.pipeline_mode<synchronous>, transform_indices = @transform_3, window_bounds = array<i64: 32, 64>}, {transform_indices = @transform_4, window_bounds = array<i64: 4, 8, 32>}, {transform_indices = @transform_5, window_bounds = array<i64: 4, 8, 8>}]} {
    %c0 = arith.constant 0 : index
    %c0_0 = arith.constant 0 : index
    %c0_1 = arith.constant 0 : index
    %0 = vector.load %arg1[%c0, %c0_0, %c0_1] : memref<4x8x32xf32, #tpu.memory_space<vmem>>, vector<4x8x32xf32>
    %c0_2 = arith.constant 0 : index
    %c0_3 = arith.constant 0 : index
    %c0_4 = arith.constant 0 : index
    %1 = vector.load %arg2[%c0_2, %c0_3, %c0_4] : memref<4x8x32xf32, #tpu.memory_space<vmem>>, vector<4x8x32xf32>
    %c0_5 = arith.constant 0 : index
    %c0_6 = arith.constant 0 : index
    %2 = vector.load %arg3[%c0_5, %c0_6] : memref<1x32xf32, #tpu.memory_space<vmem>>, vector<1x32xf32>
    %3 = arith.negf %2 : vector<1x32xf32>
    %4 = math.exp %3 : vector<1x32xf32>
    %cst = arith.constant 1.000000e+00 : f32
    %5 = vector.broadcast %cst : f32 to vector<1x32xf32>
    %6 = arith.addf %5, %4 : vector<1x32xf32>
    %7 = arith.divf %5, %6 : vector<1x32xf32>
    %cst_7 = arith.constant 1.000000e+00 : f32
    %8 = vector.broadcast %cst_7 : f32 to vector<1x32xf32>
    %9 = arith.subf %8, %7 : vector<1x32xf32>
    %cst_8 = arith.constant 5.000000e-01 : f32
    %10 = vector.broadcast %cst_8 : f32 to vector<1x32xf32>
    %11 = arith.mulf %10, %9 : vector<1x32xf32>
    %12 = vector.shape_cast %7 : vector<1x32xf32> to vector<1x1x32xf32>
    %13 = vector.broadcast %12 : vector<1x1x32xf32> to vector<4x8x32xf32>
    %14 = arith.mulf %0, %13 : vector<4x8x32xf32>
    %15 = vector.shape_cast %11 : vector<1x32xf32> to vector<1x1x32xf32>
    %16 = vector.broadcast %15 : vector<1x1x32xf32> to vector<4x8x32xf32>
    %17 = arith.mulf %1, %16 : vector<4x8x32xf32>
    %18 = arith.addf %14, %17 : vector<4x8x32xf32>
    %c0_9 = arith.constant 0 : index
    %c0_10 = arith.constant 0 : index
    %c0_11 = arith.constant 0 : index
    %19 = vector.load %arg5[%c0_9, %c0_10, %c0_11] : memref<4x8x32xf32, #tpu.memory_space<vmem>>, vector<4x8x32xf32>
    tpu.vector_store %arg5[%c0_9, %c0_10, %c0_11], %18 {strides = array<i32>} : memref<4x8x32xf32, #tpu.memory_space<vmem>>, vector<4x8x32xf32>,
    %20 = vector.shape_cast %18 : vector<4x8x32xf32> to vector<32x32xf32>
    %21 = arith.truncf %20 : vector<32x32xf32> to vector<32x32xbf16>
    %c0_12 = arith.constant 0 : index
    %c0_13 = arith.constant 0 : index
    %22 = vector.load %arg4[%c0_12, %c0_13] : memref<32x64xbf16, #tpu.memory_space<vmem>>, vector<32x64xbf16>
    %cst_14 = arith.constant dense<0.000000e+00> : vector<32x64xf32>
    %23 = tpu.matmul %21, %22, %cst_14 {dimension_numbers = #tpu.dot_dimension_numbers<[1], [0], [0], [1], [0, 0, 1, 1], [], []>} : vector<32x32xbf16>, vector<32x64xbf16>, vector<32x64xf32> -> vector<32x64xf32>
    %cst_15 = arith.constant 0.000000e+00 : f32
    %24 = vector.broadcast %cst_15 : f32 to vector<32x64xf32>
    %25 = arith.maximumf %23, %24 : vector<32x64xf32>
    %26 = vector.shape_cast %25 : vector<32x64xf32> to vector<4x8x64xf32>
    %27 = arith.truncf %26 : vector<4x8x64xf32> to vector<4x8x64xbf16>
    %cst_16 = arith.constant dense<0.000000e+00> : vector<4x8x8xf32>
    %28 = tpu.matmul %27, %27, %cst_16 {dimension_numbers = #tpu.dot_dimension_numbers<[2], [2], [1], [1], [0, 0, 0, 1, 1, 1], [0], [0]>} : vector<4x8x64xbf16>, vector<4x8x64xbf16>, vector<4x8x8xf32> -> vector<4x8x8xf32>
    %cst_17 = arith.constant 5.000000e-01 : f32
    %29 = vector.broadcast %cst_17 : f32 to vector<4x8x8xf32>
    %30 = arith.mulf %28, %29 : vector<4x8x8xf32>
    %31 = arith.negf %30 : vector<4x8x8xf32>
    %32 = math.exp %31 : vector<4x8x8xf32>
    %cst_18 = arith.constant 1.000000e+00 : f32
    %33 = vector.broadcast %cst_18 : f32 to vector<4x8x8xf32>
    %34 = arith.addf %33, %32 : vector<4x8x8xf32>
    %35 = arith.divf %33, %34 : vector<4x8x8xf32>
    %cst_19 = arith.constant 3.000000e-01 : f32
    %36 = vector.broadcast %cst_19 : f32 to vector<4x8x8xf32>
    %37 = arith.cmpf ogt, %35, %36 : vector<4x8x8xf32>
    %cst_20 = arith.constant -1.000000e+20 : f32
    %38 = vector.broadcast %cst_20 : f32 to vector<4x8x8xf32>
    %39 = arith.select %37, %35, %38 : vector<4x8x8xi1>, vector<4x8x8xf32>
    %cst_21 = arith.constant dense<0xFF800000> : vector<4x8xf32>
    %40 = vector.multi_reduction <maximumf>, %39, %cst_21 [2] : vector<4x8x8xf32> to vector<4x8xf32>
    %41 = vector.shape_cast %40 : vector<4x8xf32> to vector<4x8x1xf32>
    %42 = vector.broadcast %41 : vector<4x8x1xf32> to vector<4x8x8xf32>
    %43 = arith.subf %39, %42 : vector<4x8x8xf32>
    %44 = math.exp %43 : vector<4x8x8xf32>
    %cst_22 = arith.constant dense<0.000000e+00> : vector<4x8xf32>
    %45 = vector.multi_reduction <add>, %44, %cst_22 [2] : vector<4x8x8xf32> to vector<4x8xf32>
    %46 = vector.shape_cast %45 : vector<4x8xf32> to vector<4x8x1xf32>
    %47 = tpu.reciprocal %46 {approx = true} : vector<4x8x1xf32> -> vector<4x8x1xf32>
    %48 = vector.broadcast %47 : vector<4x8x1xf32> to vector<4x8x8xf32>
    %49 = arith.mulf %44, %48 : vector<4x8x8xf32>
    %c0_23 = arith.constant 0 : index
    %c0_24 = arith.constant 0 : index
    %c0_25 = arith.constant 0 : index
    %50 = vector.load %arg6[%c0_23, %c0_24, %c0_25] : memref<4x8x8xf32, #tpu.memory_space<vmem>>, vector<4x8x8xf32>
    tpu.vector_store %arg6[%c0_23, %c0_24, %c0_25], %49 {strides = array<i32>} : memref<4x8x8xf32, #tpu.memory_space<vmem>>, vector<4x8x8xf32>,
    return
  }
  func.func @transform_0(%arg0: i32) -> (i32, i32, i32) {
    %c0_i32 = arith.constant 0 : i32
    %c0_i32_0 = arith.constant 0 : i32
    %c0_i32_1 = arith.constant 0 : i32
    return %arg0, %c0_i32, %c0_i32_0 : i32, i32, i32
  }
  func.func @transform_1(%arg0: i32) -> (i32, i32, i32) {
    %c0_i32 = arith.constant 0 : i32
    %c0_i32_0 = arith.constant 0 : i32
    %c0_i32_1 = arith.constant 0 : i32
    return %arg0, %c0_i32, %c0_i32_0 : i32, i32, i32
  }
  func.func @transform_2(%arg0: i32) -> (i32, i32) {
    %c0_i32 = arith.constant 0 : i32
    %c0_i32_0 = arith.constant 0 : i32
    %c0_i32_1 = arith.constant 0 : i32
    return %c0_i32, %c0_i32_0 : i32, i32
  }
  func.func @transform_3(%arg0: i32) -> (i32, i32) {
    %c0_i32 = arith.constant 0 : i32
    %c0_i32_0 = arith.constant 0 : i32
    %c0_i32_1 = arith.constant 0 : i32
    return %c0_i32, %c0_i32_0 : i32, i32
  }
  func.func @transform_4(%arg0: i32) -> (i32, i32, i32) {
    %c0_i32 = arith.constant 0 : i32
    %c0_i32_0 = arith.constant 0 : i32
    %c0_i32_1 = arith.constant 0 : i32
    return %arg0, %c0_i32, %c0_i32_0 : i32, i32, i32
  }
  func.func @transform_5(%arg0: i32) -> (i32, i32, i32) {
    %c0_i32 = arith.constant 0 : i32
    %c0_i32_0 = arith.constant 0 : i32
    %c0_i32_1 = arith.constant 0 : i32
    return %arg0, %c0_i32, %c0_i32_0 : i32, i32, i32
  }
}

</mosaic_0001>

<llo_original>
// kernel: tpu_custom_call.1
$region0: #{tpu_custom_call.1}
  #allocation0 [shape = 'u32[]', space=smem, size = 0x4, offset = 0x4, fixed_abs, tag = 'smem constant byte address 0x4 - core index']
  #allocation1 [shape = 'u32[72,128]{1,0:T(1,128)}', space=vmem, size = 0x9000, scoped, tag = 'internal scratch']
  %s0 = inlined_call_operand.hbm [shape: f32[8,8,32], index: 0, kind: input, shape index: {}]
  %s1 = inlined_call_operand.hbm [shape: f32[8,8,32], index: 1, kind: input, shape index: {}]
  %s2 = inlined_call_operand.vmem [shape: f32[1,32], index: 2, kind: input, shape index: {}]
  %s3 = inlined_call_operand.hbm [shape: bf16[32,64], index: 3, kind: input, shape index: {}]
  %s4 = inlined_call_operand.hbm [shape: f32[8,8,32], index: 4, kind: output, shape index: {0}]
  %s5 = inlined_call_operand.hbm [shape: f32[8,8,8], index: 5, kind: output, shape index: {1}]
  %6 = xla_tuple %s4, %s5
  %s7 = sld [smem:[#allocation0]]
  $region69: #{tpu_custom_call.1} parent=0
    _
  %s9 = ssub.s32 1, %s7
  %s10 = scalar_select 0, %s9, %s7
  $region1: #{tpu_custom_call.1} parent=0
    #allocation2 [shape = 'u8[32768]{0}', space=vmem, size = 0x8000, scoped, tag = 'input window, operand 0']
    #allocation3 [shape = 's32[2]{0}', space=sflag, size = 0x8, scoped, tag = 'scoped memory for tpu_custom_call.1']
    #allocation4 [shape = 's32[2]{0}', space=sflag, size = 0x8, scoped, tag = 'scoped memory for tpu_custom_call.1']
    #allocation5 [shape = 'u8[32768]{0}', space=vmem, size = 0x8000, scoped, tag = 'input window, operand 1']
    #allocation6 [shape = 's32[2]{0}', space=sflag, size = 0x8, scoped, tag = 'scoped memory for tpu_custom_call.1']
    #allocation7 [shape = 'u8[8192]{0}', space=vmem, size = 0x2000, scoped, tag = 'input window, operand 3, single buffered']
    #allocation8 [shape = 'u8[32768]{0}', space=vmem, size = 0x8000, scoped, tag = 'output window, operand 0']
    #allocation9 [shape = 'u8[32768]{0}', space=vmem, size = 0x8000, scoped, tag = 'output window, operand 1']
    #allocation10 [shape = 's32[2]{0}', space=sflag, size = 0x8, scoped, tag = 'scoped memory for tpu_custom_call.1']
    %11 = vsyncpa [#allocation3], 0
    %s12 = scalar_lea.sflag [#allocation3], 1
    %13 = vsyncpa %s12, 0
    %14 = vsyncpa [#allocation6], 0
    %s15 = scalar_lea.sflag [#allocation6], 1
    %16 = vsyncpa %s15, 0
    %17 = vsyncpa [#allocation4], 0
    %s18 = scalar_lea.sflag [#allocation4], 1
    %19 = vsyncpa %s18, 0
    %20 = vsyncpa [#allocation10], 0
    %s21 = scalar_lea.sflag [#allocation10], 1
    %22 = vsyncpa %s21, 0
    loop: start=0, step=1, limit=4
    $region2: #{tpu_custom_call.1} parent=1 // loop_pre_header
      _
    $region3: #{tpu_custom_call.1} parent=1 // loop_header
      %s24 = sphi 0, %s28
      %p25 = scmp.ge.s32.totalorder %s24, 4
      %s34 = sphi 0, %s36
      %s37 = sphi 0, %s34
      %s38 = sphi 0, %s37
      %s54 = sphi 0, %s38
      %s60 = sphi 0, %s62
      %s63 = sphi 0, %s60
      %s64 = sphi 0, %s63
      %s80 = sphi 0, %s64
      %s84 = sphi 0, %s84
      %s86 = sphi 0, %s84
      %s87 = sphi 0, %s86
      %s101 = sphi 0, %s87
      %s105 = sphi 0, %s105
      %s107 = sphi 0, %s105
      %s108 = sphi 0, %s107
      %s122 = sphi 0, %s108
      %s128 = sphi 0, %s130
      %s131 = sphi 0, %s128
      %s132 = sphi 0, %s131
      %s148 = sphi 0, %s132
      %s154 = sphi 0, %s156
      %s157 = sphi 0, %s154
      %s158 = sphi 0, %s157
      %s174 = sphi 0, %s158
    $region4: #{tpu_custom_call.1} parent=1 // loop_header_branch
      %27 = sbr.rel (%p25) target = $region8
    $region5: #{tpu_custom_call.1} parent=1 // loop_body
      %s29 = ssub.s32 %s24, 1
      %s30 = ssub.s32 %s24, 2
      %s31 = sadd.s32 %s24, 1
      %s32 = ssub.s32 %s24, %s31
      %p33 = scmp.eq.s32.totalorder %s32, 0
      %s35 = sadd.s32 %s34, 1
      %s36 = scalar_select %p33, %s34, %s35
      %p39 = pneg %p33
      %p40 = scmp.eq.s32.totalorder %s24, 1
      %p41 = por %p39, %p40
      %p42 = scmp.ne.s32.totalorder %s34, %s37
      %p43 = scmp.eq.s32.totalorder %s24, 0
      %p44 = por %p42, %p43
      %p45 = scmp.ne.s32.totalorder %s34, %s37
      %p46 = scmp.eq.s32.totalorder %s29, 1
      %p47 = por %p45, %p46
      %p48 = scmp.ne.s32.totalorder %s37, %s38
      %p49 = scmp.eq.s32.totalorder %s29, 0
      %p50 = por %p48, %p49
      %p51 = scmp.ne.s32.totalorder %s37, %s38
      %p52 = scmp.eq.s32.totalorder %s30, 1
      %p53 = por %p51, %p52
      %p55 = scmp.ne.s32.totalorder %s38, %s54
      %p56 = scmp.eq.s32.totalorder %s30, 0
      %p57 = por %p55, %p56
      %s58 = ssub.s32 %s24, %s31
      %p59 = scmp.eq.s32.totalorder %s58, 0
      %s61 = sadd.s32 %s60, 1
      %s62 = scalar_select %p59, %s60, %s61
      %p65 = pneg %p59
      %p66 = scmp.eq.s32.totalorder %s24, 1
      %p67 = por %p65, %p66
      %p68 = scmp.ne.s32.totalorder %s60, %s63
      %p69 = scmp.eq.s32.totalorder %s24, 0
      %p70 = por %p68, %p69
      %p71 = scmp.ne.s32.totalorder %s60, %s63
      %p72 = scmp.eq.s32.totalorder %s29, 1
      %p73 = por %p71, %p72
      %p74 = scmp.ne.s32.totalorder %s63, %s64
      %p75 = scmp.eq.s32.totalorder %s29, 0
      %p76 = por %p74, %p75
      %p77 = scmp.ne.s32.totalorder %s63, %s64
      %p78 = scmp.eq.s32.totalorder %s30, 1
      %p79 = por %p77, %p78
      %p81 = scmp.ne.s32.totalorder %s64, %s80
      %p82 = scmp.eq.s32.totalorder %s30, 0
      %p83 = por %p81, %p82
      %s85 = sadd.s32 %s84, 1
      %p88 = scmp.eq.s32.totalorder %s24, 1
      %p89 = scmp.ne.s32.totalorder %s84, %s86
      %p90 = scmp.eq.s32.totalorder %s24, 0
      %p91 = por %p89, %p90
      %p92 = scmp.ne.s32.totalorder %s84, %s86
      %p93 = scmp.eq.s32.totalorder %s29, 1
      %p94 = por %p92, %p93
      %p95 = scmp.ne.s32.totalorder %s86, %s87
      %p96 = scmp.eq.s32.totalorder %s29, 0
      %p97 = por %p95, %p96
      %p98 = scmp.ne.s32.totalorder %s86, %s87
      %p99 = scmp.eq.s32.totalorder %s30, 1
      %p100 = por %p98, %p99
      %p102 = scmp.ne.s32.totalorder %s87, %s101
      %p103 = scmp.eq.s32.totalorder %s30, 0
      %p104 = por %p102, %p103
      %s106 = sadd.s32 %s105, 1
      %p109 = scmp.eq.s32.totalorder %s24, 1
      %p110 = scmp.ne.s32.totalorder %s105, %s107
      %p111 = scmp.eq.s32.totalorder %s24, 0
      %p112 = por %p110, %p111
      %p113 = scmp.ne.s32.totalorder %s105, %s107
      %p114 = scmp.eq.s32.totalorder %s29, 1
      %p115 = por %p113, %p114
      %p116 = scmp.ne.s32.totalorder %s107, %s108
      %p117 = scmp.eq.s32.totalorder %s29, 0
      %p118 = por %p116, %p117
      %p119 = scmp.ne.s32.totalorder %s107, %s108
      %p120 = scmp.eq.s32.totalorder %s30, 1
      %p121 = por %p119, %p120
      %p123 = scmp.ne.s32.totalorder %s108, %s122
      %p124 = scmp.eq.s32.totalorder %s30, 0
      %p125 = por %p123, %p124
      %s126 = ssub.s32 %s24, %s31
      %p127 = scmp.eq.s32.totalorder %s126, 0
      %s129 = sadd.s32 %s128, 1
      %s130 = scalar_select %p127, %s128, %s129
      %p133 = pneg %p127
      %p134 = scmp.eq.s32.totalorder %s24, 1
      %p135 = por %p133, %p134
      %p136 = scmp.ne.s32.totalorder %s128, %s131
      %p137 = scmp.eq.s32.totalorder %s24, 0
      %p138 = por %p136, %p137
      %p139 = scmp.ne.s32.totalorder %s128, %s131
      %p140 = scmp.eq.s32.totalorder %s29, 1
      %p141 = por %p139, %p140
      %p142 = scmp.ne.s32.totalorder %s131, %s132
      %p143 = scmp.eq.s32.totalorder %s29, 0
      %p144 = por %p142, %p143
      %p145 = scmp.ne.s32.totalorder %s131, %s132
      %p146 = scmp.eq.s32.totalorder %s30, 1
      %p147 = por %p145, %p146
      %p149 = scmp.ne.s32.totalorder %s132, %s148
      %p150 = scmp.eq.s32.totalorder %s30, 0
      %p151 = por %p149, %p150
      %s152 = ssub.s32 %s24, %s31
      %p153 = scmp.eq.s32.totalorder %s152, 0
      %s155 = sadd.s32 %s154, 1
      %s156 = scalar_select %p153, %s154, %s155
      %p159 = pneg %p153
      %p160 = scmp.eq.s32.totalorder %s24, 1
      %p161 = por %p159, %p160
      %p162 = scmp.ne.s32.totalorder %s154, %s157
      %p163 = scmp.eq.s32.totalorder %s24, 0
      %p164 = por %p162, %p163
      %p165 = scmp.ne.s32.totalorder %s154, %s157
      %p166 = scmp.eq.s32.totalorder %s29, 1
      %p167 = por %p165, %p166
      %p168 = scmp.ne.s32.totalorder %s157, %s158
      %p169 = scmp.eq.s32.totalorder %s29, 0
      %p170 = por %p168, %p169
      %p171 = scmp.ne.s32.totalorder %s157, %s158
      %p172 = scmp.eq.s32.totalorder %s30, 1
      %p173 = por %p171, %p172
      %p175 = scmp.ne.s32.totalorder %s158, %s174
      %p176 = scmp.eq.s32.totalorder %s30, 0
      %p177 = por %p175, %p176
      %p178 = scmp.le.s32.totalorder 1, %s24
      %p179 = scmp.lt.s32.totalorder %s24, 3
      %p180 = pnand %p178, %p179
      %p181 = pneg %p180
      // Predicated region
      $region9: #{tpu_custom_call.1} parent=5 // pred_check
        _
      $region10: #{tpu_custom_call.1} parent=5 // pred_check_branch
        %183 = sbr.rel (%p180) target = $region12
      $region11: #{tpu_custom_call.1} parent=5 // pred_region
        %s184 = ssub.s32 %s24, 1
        // Predicated region
        $region13: #{tpu_custom_call.1} parent=11 // pred_check
          %p185 = pneg %p97
        $region14: #{tpu_custom_call.1} parent=11 // pred_check_branch
          %187 = sbr.rel (%p185) target = $region16
        $region15: #{tpu_custom_call.1} parent=11 // pred_region
          _
        $region16: #{tpu_custom_call.1} parent=11 // pred_fallthru
          _
        // Predicated region
        $region17: #{tpu_custom_call.1} parent=11 // pred_check
          %p188 = pneg %p118
        $region18: #{tpu_custom_call.1} parent=11 // pred_check_branch
          %190 = sbr.rel (%p188) target = $region20
        $region19: #{tpu_custom_call.1} parent=11 // pred_region
          %192 = vsyncadd [#allocation6], 0
          %s193 = sshll.u32 %s3, 4
          %s194 = int_to_ptr.hbm [resolvable:$true] %s193
          %s195 = sshll.u32 [#allocation7], 4
          %s196 = int_to_ptr.vmem [resolvable:$true] %s195
          %201 = dma.hbm_to_vmem [thread:$0]  %s194, 256, %s196, [#allocation6], 64, 64, 4
        $region20: #{tpu_custom_call.1} parent=11 // pred_fallthru
          _
      $region12: #{tpu_custom_call.1} parent=5 // pred_fallthru
        _
      %p202 = scmp.lt.s32.totalorder %s24, 2
      // Predicated region
      $region21: #{tpu_custom_call.1} parent=5 // pred_check
        %p203 = pneg %p202
      $region22: #{tpu_custom_call.1} parent=5 // pred_check_branch
        %205 = sbr.rel (%p203) target = $region24
      $region23: #{tpu_custom_call.1} parent=5 // pred_region
        // Predicated region
        $region25: #{tpu_custom_call.1} parent=23 // pred_check
          %p206 = pneg %p44
        $region26: #{tpu_custom_call.1} parent=23 // pred_check_branch
          %208 = sbr.rel (%p206) target = $region28
        $region27: #{tpu_custom_call.1} parent=23 // pred_region
          %s209 = sand.u32 %s34, 1
          %s210 = scalar_lea.sflag [#allocation3], %s209
          %s211 = sand.u32 %s34, 1
          %s212 = smul.addr %s211, 32
          %s213 = scalar_lea.vmem [#allocation2], %s212
          %s214 = smul.u32 4, %s24
          %216 = vsyncadd %s210, 0
          %s217 = smul.addr %s214, 8
          %s218 = scalar_lea.hbm %s0, %s217
          %s219 = sshll.u32 %s218, 4
          %s220 = int_to_ptr.hbm [resolvable:$true] %s219
          %s221 = sshll.u32 %s213, 4
          %s222 = int_to_ptr.vmem [resolvable:$true] %s221
          %227 = dma.hbm_to_vmem [thread:$0]  %s220, 512, %s222, %s210, 128, 128, 8
        $region28: #{tpu_custom_call.1} parent=23 // pred_fallthru
          _
        // Predicated region
        $region29: #{tpu_custom_call.1} parent=23 // pred_check
          %p228 = pneg %p70
        $region30: #{tpu_custom_call.1} parent=23 // pred_check_branch
          %230 = sbr.rel (%p228) target = $region32
        $region31: #{tpu_custom_call.1} parent=23 // pred_region
          %s231 = sand.u32 %s24, 1
          %s232 = scalar_lea.sflag [#allocation6], %s231
          %s233 = sand.u32 %s60, 1
          %s234 = smul.addr %s233, 32
          %s235 = scalar_lea.vmem [#allocation5], %s234
          %s236 = smul.u32 4, %s24
          %238 = vsyncadd %s232, 0
          %s239 = smul.addr %s236, 8
          %s240 = scalar_lea.hbm %s1, %s239
          %s241 = sshll.u32 %s240, 4
          %s242 = int_to_ptr.hbm [resolvable:$true] %s241
          %s243 = sshll.u32 %s235, 4
          %s244 = int_to_ptr.vmem [resolvable:$true] %s243
          %249 = dma.hbm_to_vmem [thread:$0]  %s242, 512, %s244, %s232, 128, 128, 8
        $region32: #{tpu_custom_call.1} parent=23 // pred_fallthru
          _
      $region24: #{tpu_custom_call.1} parent=5 // pred_fallthru
        _
      %p250 = scmp.le.s32.totalorder 1, %s24
      %p251 = scmp.lt.s32.totalorder %s24, 3
      %p252 = pnand %p250, %p251
      %p253 = pneg %p252
      // Predicated region
      $region33: #{tpu_custom_call.1} parent=5 // pred_check
        _
      $region34: #{tpu_custom_call.1} parent=5 // pred_check_branch
        %255 = sbr.rel (%p252) target = $region36
      $region35: #{tpu_custom_call.1} parent=5 // pred_region
        %s256 = ssub.s32 %s24, 1
        %s257 = sand.u32 %s37, 1
        %s258 = scalar_lea.sflag [#allocation3], %s257
        %s259 = sand.u32 %s37, 1
        %s260 = smul.addr %s259, 32
        %s261 = scalar_lea.vmem [#allocation2], %s260
        // Predicated region
        $region37: #{tpu_custom_call.1} parent=35 // pred_check
          %p262 = pneg %p50
        $region38: #{tpu_custom_call.1} parent=35 // pred_check_branch
          %264 = sbr.rel (%p262) target = $region40
        $region39: #{tpu_custom_call.1} parent=35 // pred_region
          %266 = dma.done %s258, 512
        $region40: #{tpu_custom_call.1} parent=35 // pred_fallthru
          _
        %s267 = sand.u32 %s29, 1
        %s268 = scalar_lea.sflag [#allocation6], %s267
        %s269 = sand.u32 %s63, 1
        %s270 = smul.addr %s269, 32
        %s271 = scalar_lea.vmem [#allocation5], %s270
        // Predicated region
        $region41: #{tpu_custom_call.1} parent=35 // pred_check
          %p272 = pneg %p76
        $region42: #{tpu_custom_call.1} parent=35 // pred_check_branch
          %274 = sbr.rel (%p272) target = $region44
        $region43: #{tpu_custom_call.1} parent=35 // pred_region
          %276 = dma.done %s268, 512
        $region44: #{tpu_custom_call.1} parent=35 // pred_fallthru
          _
        // Predicated region
        $region45: #{tpu_custom_call.1} parent=35 // pred_check
          %p277 = pneg %p118
        $region46: #{tpu_custom_call.1} parent=35 // pred_check_branch
          %279 = sbr.rel (%p277) target = $region48
        $region47: #{tpu_custom_call.1} parent=35 // pred_region
          %281 = dma.done [#allocation6], 256
        $region48: #{tpu_custom_call.1} parent=35 // pred_fallthru
          _
        %s282 = sand.u32 %s37, 1
        %s283 = scalar_lea.sflag [#allocation3], %s282
        %s284 = sand.u32 %s37, 1
        %s285 = smul.addr %s284, 32
        %s286 = scalar_lea.vmem [#allocation2], %s285
        %p287 = pneg %p50
        %p288 = pneg %p47
        %s289 = sand.u32 %s29, 1
        %s290 = scalar_lea.sflag [#allocation6], %s289
        %s291 = sand.u32 %s63, 1
        %s292 = smul.addr %s291, 32
        %s293 = scalar_lea.vmem [#allocation5], %s292
        %p294 = pneg %p76
        %p295 = pneg %p73
        %p296 = pneg %p97
        %p297 = pneg %p94
        %p298 = pneg %p118
        %p299 = pneg %p115
        %p300 = pneg %p144
        %p301 = pneg %p141
        %s302 = sand.u32 %s131, 1
        %s303 = scalar_lea.sflag [#allocation4], %s302
        %s304 = sand.u32 %s131, 1
        %s305 = smul.addr %s304, 32
        %s306 = scalar_lea.vmem [#allocation8], %s305
        %p307 = pneg %p170
        %p308 = pneg %p167
        %s309 = sand.u32 %s157, 1
        %s310 = scalar_lea.sflag [#allocation10], %s309
        %s311 = sand.u32 %s157, 1
        %s312 = smul.addr %s311, 32
        %s313 = scalar_lea.vmem [#allocation9], %s312
        %s314 = smul.u32 4, %s29
        %s315 = smul.u32 4, %s29
        %s316 = smul.u32 4, %s29
        %s317 = smul.u32 4, %s29
        %v319 = vld [vmem:[%s261] sm:$0xff]
        %v320 = vld [vmem:[%s261 + $0x8] sm:$0xff]
        %v321 = vld [vmem:[%s261 + $0x10] sm:$0xff]
        %v322 = vld [vmem:[%s261 + $0x18] sm:$0xff]
        %v323 = vld [vmem:[%s271] sm:$0xff]
        %v324 = vld [vmem:[%s271 + $0x8] sm:$0xff]
        %v325 = vld [vmem:[%s271 + $0x10] sm:$0xff]
        %v326 = vld [vmem:[%s271 + $0x18] sm:$0xff]
        %v327 = vld [vmem:[%s2] sm:$0x1]
        %v328 = vxor.u32 %v327, 2147483648
        %v329 = vmul.f32 %v328, 1.442695
        %v330 = vpow.pop %v329
        %v331 = vadd.f32 %v330, 1.0
        %v332 = vrcp.pop %v331
        %v333 = vmul.f32 %v331, %v332
        %v334 = vsub.f32 1.0, %v333
        %v335 = vmul.f32 %v332, %v334
        %v336 = vadd.f32 %v332, %v335
        %vm337 = vweird.f32 %v331
        %vm338 = vweird.f32 %v332
        %vm339 = vmor %vm337, %vm338
        %v340 = vsel %vm339, %v332, %v336
        %v341 = vand.u32 2147483647, %v331
        %vm342 = vcmp.eq.f32.partialorder %v341, 8.507059e+37
        %v343 = vand.u32 %v331, 2147483648
        %v344 = vor.u32 1.1754944e-38, %v343
        %v345 = vsel %vm342, %v344, %v340
        %v346 = vmul.f32 1.0, %v345
        %v347 = vsub.f32 1.0, %v346
        %v348 = vmul.f32 %v347, 0.5
        %v350 = vperm.slane %v346, 0
        %v352 = vmul.f32 %v319, %v350
        %v353 = vmul.f32 %v320, %v350
        %v354 = vmul.f32 %v321, %v350
        %v355 = vmul.f32 %v322, %v350
        %v357 = vperm.slane %v348, 0
        %v359 = vmul.f32 %v323, %v357
        %v360 = vmul.f32 %v324, %v357
        %v361 = vmul.f32 %v325, %v357
        %v362 = vmul.f32 %v326, %v357
        %v363 = vadd.f32 %v352, %v359
        %v364 = vadd.f32 %v353, %v360
        %v365 = vadd.f32 %v354, %v361
        %v366 = vadd.f32 %v355, %v362
        %vm367 = vcmask 261120
        %368 = vst.msk [vmem:[%s306] sm:$0xff] %vm367, %v363
        %369 = vst.msk [vmem:[%s306 + $0x8] sm:$0xff] %vm367, %v364
        %370 = vst.msk [vmem:[%s306 + $0x10] sm:$0xff] %vm367, %v365
        %371 = vst.msk [vmem:[%s306 + $0x18] sm:$0xff] %vm367, %v366
        %v372 = vpack.c.bf16 %v364, %v363
        %v373 = vpack.c.bf16 %v366, %v365
        %v374 = vld [vmem:[#allocation7] sm:$0xf]
        %v375 = vld [vmem:[#allocation7 + $0x4] sm:$0xf]
        %v376 = vld [vmem:[#allocation7 + $0x8] sm:$0xf]
        %v377 = vld [vmem:[#allocation7 + $0xc] sm:$0xf]
        %v382 = vunpack.c.l.b16 %v374
        %v383 = vunpack.c.l.b16 %v375
        %v384 = vunpack.c.l.b16 %v376
        %v385 = vunpack.c.l.b16 %v377
        %v386 = vpack.c.b16 %v383, %v382
        %v387 = vpack.c.b16 %v385, %v384
        %v391 = vsel %vm367, %v372, 0
        %v394 = vsel %vm367, %v373, 0
        %396 = vmatpush.bf16.msra.mxu0 0
        %397 = vmatpush.bf16.msra.mxu0 0
        %398 = vmatpush.bf16.msra.mxu0 0
        %399 = vmatpush.bf16.msra.mxu0 0
        %400 = vmatpush.bf16.msra.mxu0 0
        %401 = vmatpush.bf16.msra.mxu0 0
        %402 = vmatpush.bf16.msra.mxu0 %v387
        %403 = vmatpush.bf16.msra.mxu0 %v386
        %404 = vmatmul.bf16.gmra.mxu0 %v391
        %v405 = vpop.f32.mrf.mxu0
        %v406 = vadd.f32 0.0, %v405
        %v407 = vpop.f32.mrf.mxu0
        %v408 = vadd.f32 0.0, %v407
        %409 = vmatmul.bf16.gmra.mxu0 %v394
        %v410 = vpop.f32.mrf.mxu0
        %v411 = vadd.f32 0.0, %v410
        %v412 = vpop.f32.mrf.mxu0
        %v413 = vadd.f32 0.0, %v412
        %414 = vdwg.mxu0
        %v415 = vmax.f32 %v406, 0.0
        %v416 = vmax.f32 %v408, 0.0
        %v417 = vmax.f32 %v411, 0.0
        %v418 = vmax.f32 %v413, 0.0
        %v419 = vpack.c.bf16 %v415, %v415
        %v420 = vpack.c.bf16 %v416, %v416
        %v421 = vpack.c.bf16 %v417, %v417
        %v422 = vpack.c.bf16 %v418, %v418
        %vm423 = vcmask 523264
        %v425 = vsel %vm423, %v419, 0
        %427 = vmatpush.bf16.xpose.msra.mxu0 0
        %428 = vmatpush.bf16.xpose.msra.mxu0 0
        %429 = vmatpush.bf16.xpose.msra.mxu0 0
        %430 = vmatpush.bf16.xpose.msra.mxu0 0
        %431 = vmatpush.bf16.xpose.msra.mxu0 0
        %432 = vmatpush.bf16.xpose.msra.mxu0 0
        %433 = vmatpush.bf16.xpose.msra.mxu0 0
        %434 = vmatpush.bf16.xpose.msra.mxu0 %v425
        %435 = vmatmul.bf16.gmra.mxu0 %v425
        %v436 = vpop.f32.mrf.mxu0
        %v437 = vadd.f32 0.0, %v436
        %v438 = vpop.f32.mrf.mxu0
        %439 = vdwg.mxu0
        %v441 = vsel %vm423, %v420, 0
        %443 = vmatpush.bf16.xpose.msra.mxu0 0
        %444 = vmatpush.bf16.xpose.msra.mxu0 0
        %445 = vmatpush.bf16.xpose.msra.mxu0 0
        %446 = vmatpush.bf16.xpose.msra.mxu0 0
        %447 = vmatpush.bf16.xpose.msra.mxu0 0
        %448 = vmatpush.bf16.xpose.msra.mxu0 0
        %449 = vmatpush.bf16.xpose.msra.mxu0 0
        %450 = vmatpush.bf16.xpose.msra.mxu0 %v441
        %451 = vmatmul.bf16.gmra.mxu0 %v441
        %v452 = vpop.f32.mrf.mxu0
        %v453 = vadd.f32 0.0, %v452
        %v454 = vpop.f32.mrf.mxu0
        %455 = vdwg.mxu0
        %v457 = vsel %vm423, %v421, 0
        %459 = vmatpush.bf16.xpose.msra.mxu0 0
        %460 = vmatpush.bf16.xpose.msra.mxu0 0
        %461 = vmatpush.bf16.xpose.msra.mxu0 0
        %462 = vmatpush.bf16.xpose.msra.mxu0 0
        %463 = vmatpush.bf16.xpose.msra.mxu0 0
        %464 = vmatpush.bf16.xpose.msra.mxu0 0
        %465 = vmatpush.bf16.xpose.msra.mxu0 0
        %466 = vmatpush.bf16.xpose.msra.mxu0 %v457
        %467 = vmatmul.bf16.gmra.mxu0 %v457
        %v468 = vpop.f32.mrf.mxu0
        %v469 = vadd.f32 0.0, %v468
        %v470 = vpop.f32.mrf.mxu0
        %471 = vdwg.mxu0
        %v473 = vsel %vm423, %v422, 0
        %475 = vmatpush.bf16.xpose.msra.mxu0 0
        %476 = vmatpush.bf16.xpose.msra.mxu0 0
        %477 = vmatpush.bf16.xpose.msra.mxu0 0
        %478 = vmatpush.bf16.xpose.msra.mxu0 0
        %479 = vmatpush.bf16.xpose.msra.mxu0 0
        %480 = vmatpush.bf16.xpose.msra.mxu0 0
        %481 = vmatpush.bf16.xpose.msra.mxu0 0
        %482 = vmatpush.bf16.xpose.msra.mxu0 %v473
        %483 = vmatmul.bf16.gmra.mxu0 %v473
        %v484 = vpop.f32.mrf.mxu0
        %v485 = vadd.f32 0.0, %v484
        %v486 = vpop.f32.mrf.mxu0
        %487 = vdwg.mxu0
        %v488 = vmul.f32 %v437, 0.5
        %v489 = vmul.f32 %v453, 0.5
        %v490 = vmul.f32 %v469, 0.5
        %v491 = vmul.f32 %v485, 0.5
        %v492 = vxor.u32 %v488, 2147483648
        %v493 = vxor.u32 %v489, 2147483648
        %v494 = vxor.u32 %v490, 2147483648
        %v495 = vxor.u32 %v491, 2147483648
        %v496 = vmul.f32 %v492, 1.442695
        %v497 = vpow.pop %v496
        %v498 = vmul.f32 %v493, 1.442695
        %v499 = vpow.pop %v498
        %v500 = vmul.f32 %v494, 1.442695
        %v501 = vpow.pop %v500
        %v502 = vmul.f32 %v495, 1.442695
        %v503 = vpow.pop %v502
        %v504 = vadd.f32 %v497, 1.0
        %v505 = vadd.f32 %v499, 1.0
        %v506 = vadd.f32 %v501, 1.0
        %v507 = vadd.f32 %v503, 1.0
        %v508 = vrcp.pop %v504
        %v509 = vmul.f32 %v504, %v508
        %v510 = vsub.f32 1.0, %v509
        %v511 = vmul.f32 %v508, %v510
        %v512 = vadd.f32 %v508, %v511
        %vm513 = vweird.f32 %v504
        %vm514 = vweird.f32 %v508
        %vm515 = vmor %vm513, %vm514
        %v516 = vsel %vm515, %v508, %v512
        %v517 = vand.u32 2147483647, %v504
        %vm518 = vcmp.eq.f32.partialorder %v517, 8.507059e+37
        %v519 = vand.u32 %v504, 2147483648
        %v520 = vor.u32 1.1754944e-38, %v519
        %v521 = vsel %vm518, %v520, %v516
        %v522 = vmul.f32 1.0, %v521
        %v523 = vrcp.pop %v505
        %v524 = vmul.f32 %v505, %v523
        %v525 = vsub.f32 1.0, %v524
        %v526 = vmul.f32 %v523, %v525
        %v527 = vadd.f32 %v523, %v526
        %vm528 = vweird.f32 %v505
        %vm529 = vweird.f32 %v523
        %vm530 = vmor %vm528, %vm529
        %v531 = vsel %vm530, %v523, %v527
        %v532 = vand.u32 2147483647, %v505
        %vm533 = vcmp.eq.f32.partialorder %v532, 8.507059e+37
        %v534 = vand.u32 %v505, 2147483648
        %v535 = vor.u32 1.1754944e-38, %v534
        %v536 = vsel %vm533, %v535, %v531
        %v537 = vmul.f32 1.0, %v536
        %v538 = vrcp.pop %v506
        %v539 = vmul.f32 %v506, %v538
        %v540 = vsub.f32 1.0, %v539
        %v541 = vmul.f32 %v538, %v540
        %v542 = vadd.f32 %v538, %v541
        %vm543 = vweird.f32 %v506
        %vm544 = vweird.f32 %v538
        %vm545 = vmor %vm543, %vm544
        %v546 = vsel %vm545, %v538, %v542
        %v547 = vand.u32 2147483647, %v506
        %vm548 = vcmp.eq.f32.partialorder %v547, 8.507059e+37
        %v549 = vand.u32 %v506, 2147483648
        %v550 = vor.u32 1.1754944e-38, %v549
        %v551 = vsel %vm548, %v550, %v546
        %v552 = vmul.f32 1.0, %v551
        %v553 = vrcp.pop %v507
        %v554 = vmul.f32 %v507, %v553
        %v555 = vsub.f32 1.0, %v554
        %v556 = vmul.f32 %v553, %v555
        %v557 = vadd.f32 %v553, %v556
        %vm558 = vweird.f32 %v507
        %vm559 = vweird.f32 %v553
        %vm560 = vmor %vm558, %vm559
        %v561 = vsel %vm560, %v553, %v557
        %v562 = vand.u32 2147483647, %v507
        %vm563 = vcmp.eq.f32.partialorder %v562, 8.507059e+37
        %v564 = vand.u32 %v507, 2147483648
        %v565 = vor.u32 1.1754944e-38, %v564
        %v566 = vsel %vm563, %v565, %v561
        %v567 = vmul.f32 1.0, %v566
        %vm568 = vcmp.gt.f32.partialorder %v522, 0.3
        %vm569 = vcmp.gt.f32.partialorder %v537, 0.3
        %vm570 = vcmp.gt.f32.partialorder %v552, 0.3
        %vm571 = vcmp.gt.f32.partialorder %v567, 0.3
        %v572 = vsel %vm568, %v522, -1e+20
        %v573 = vsel %vm569, %v537, -1e+20
        %v574 = vsel %vm570, %v552, -1e+20
        %v575 = vsel %vm571, %v567, -1e+20
        %vm576 = vcmask 64512
        %v577 = vsel %vm576, %v572, -inf
        %578 = vmax.xlane.f32.xlu0 %v577
        %v579 = vpop.xlane.xlu0 %578
        %v580 = vsel %vm576, %v573, -inf
        %581 = vmax.xlane.f32.xlu0 %v580
        %v582 = vpop.xlane.xlu0 %581
        %v583 = vsel %vm576, %v574, -inf
        %584 = vmax.xlane.f32.xlu0 %v583
        %v585 = vpop.xlane.xlu0 %584
        %v586 = vsel %vm576, %v575, -inf
        %587 = vmax.xlane.f32.xlu0 %v586
        %v588 = vpop.xlane.xlu0 %587
        %v589 = vsub.f32 %v572, %v579
        %v590 = vsub.f32 %v573, %v582
        %v591 = vsub.f32 %v574, %v585
        %v592 = vsub.f32 %v575, %v588
        %v593 = vmul.f32 %v589, 1.442695
        %v594 = vpow.pop %v593
        %v595 = vmul.f32 %v590, 1.442695
        %v596 = vpow.pop %v595
        %v597 = vmul.f32 %v591, 1.442695
        %v598 = vpow.pop %v597
        %v599 = vmul.f32 %v592, 1.442695
        %v600 = vpow.pop %v599
        %v601 = vsel %vm576, %v594, 0.0
        %602 = vadd.xlane.f32.xlu0 %v601
        %v603 = vpop.xlane.xlu0 %602
        %v604 = vsel %vm576, %v596, 0.0
        %605 = vadd.xlane.f32.xlu0 %v604
        %v606 = vpop.xlane.xlu0 %605
        %v607 = vsel %vm576, %v598, 0.0
        %608 = vadd.xlane.f32.xlu0 %v607
        %v609 = vpop.xlane.xlu0 %608
        %v610 = vsel %vm576, %v600, 0.0
        %611 = vadd.xlane.f32.xlu0 %v610
        %v612 = vpop.xlane.xlu0 %611
        %v613 = vrcp.pop %v603
        %v614 = vrcp.pop %v606
        %v615 = vrcp.pop %v609
        %v616 = vrcp.pop %v612
        %v617 = vmul.f32 %v594, %v613
        %v618 = vmul.f32 %v596, %v614
        %v619 = vmul.f32 %v598, %v615
        %v620 = vmul.f32 %v600, %v616
        %621 = vst.msk [vmem:[%s313] sm:$0xff] %vm576, %v617
        %622 = vst.msk [vmem:[%s313 + $0x8] sm:$0xff] %vm576, %v618
        %623 = vst.msk [vmem:[%s313 + $0x10] sm:$0xff] %vm576, %v619
        %624 = vst.msk [vmem:[%s313 + $0x18] sm:$0xff] %vm576, %v620
        %s625 = sand.u32 %s131, 1
        %s626 = scalar_lea.sflag [#allocation4], %s625
        %s627 = sand.u32 %s131, 1
        %s628 = smul.addr %s627, 32
        %s629 = scalar_lea.vmem [#allocation8], %s628
        %s630 = sand.u32 %s157, 1
        %s631 = scalar_lea.sflag [#allocation10], %s630
        %s632 = sand.u32 %s157, 1
        %s633 = smul.addr %s632, 32
        %s634 = scalar_lea.vmem [#allocation9], %s633
        // Predicated region
        $region49: #{tpu_custom_call.1} parent=35 // pred_check
          %p635 = pneg %p141
        $region50: #{tpu_custom_call.1} parent=35 // pred_check_branch
          %637 = sbr.rel (%p635) target = $region52
        $region51: #{tpu_custom_call.1} parent=35 // pred_region
          %s638 = smul.u32 4, %s29
          %640 = vsyncadd %s626, 0
          %s641 = smul.addr %s638, 8
          %s642 = scalar_lea.hbm %s4, %s641
          %s643 = sshll.u32 %s629, 4
          %s644 = int_to_ptr.vmem [resolvable:$true] %s643
          %s645 = sshll.u32 %s642, 4
          %s646 = int_to_ptr.hbm [resolvable:$true] %s645
          %651 = dma.vmem_to_hbm [thread:$0]  %s644, 512, %s646, %s626, 128, 128, 8
        $region52: #{tpu_custom_call.1} parent=35 // pred_fallthru
          _
        // Predicated region
        $region53: #{tpu_custom_call.1} parent=35 // pred_check
          %p652 = pneg %p167
        $region54: #{tpu_custom_call.1} parent=35 // pred_check_branch
          %654 = sbr.rel (%p652) target = $region56
        $region55: #{tpu_custom_call.1} parent=35 // pred_region
          %s655 = smul.u32 4, %s29
          %657 = vsyncadd %s631, 0
          %s658 = smul.addr %s655, 8
          %s659 = scalar_lea.hbm %s5, %s658
          %s660 = sshll.u32 %s634, 4
          %s661 = int_to_ptr.vmem [resolvable:$true] %s660
          %s662 = sshll.u32 %s659, 4
          %s663 = int_to_ptr.hbm [resolvable:$true] %s662
          %668 = dma.vmem_to_hbm [thread:$0]  %s661, 512, %s663, %s631, 128, 128, 8
        $region56: #{tpu_custom_call.1} parent=35 // pred_fallthru
          _
      $region36: #{tpu_custom_call.1} parent=5 // pred_fallthru
        _
      %p669 = scmp.le.s32.totalorder 2, %s24
      // Predicated region
      $region57: #{tpu_custom_call.1} parent=5 // pred_check
        %p670 = pneg %p669
      $region58: #{tpu_custom_call.1} parent=5 // pred_check_branch
        %672 = sbr.rel (%p670) target = $region60
      $region59: #{tpu_custom_call.1} parent=5 // pred_region
        %s673 = ssub.s32 %s24, 2
        // Predicated region
        $region61: #{tpu_custom_call.1} parent=59 // pred_check
          %p674 = pneg %p147
        $region62: #{tpu_custom_call.1} parent=59 // pred_check_branch
          %676 = sbr.rel (%p674) target = $region64
        $region63: #{tpu_custom_call.1} parent=59 // pred_region
          %s677 = sand.u32 %s132, 1
          %s678 = scalar_lea.sflag [#allocation4], %s677
          %s679 = sand.u32 %s132, 1
          %s680 = smul.addr %s679, 32
          %s681 = scalar_lea.vmem [#allocation8], %s680
          %683 = dma.done %s678, 512
        $region64: #{tpu_custom_call.1} parent=59 // pred_fallthru
          _
        // Predicated region
        $region65: #{tpu_custom_call.1} parent=59 // pred_check
          %p684 = pneg %p173
        $region66: #{tpu_custom_call.1} parent=59 // pred_check_branch
          %686 = sbr.rel (%p684) target = $region68
        $region67: #{tpu_custom_call.1} parent=59 // pred_region
          %s687 = sand.u32 %s158, 1
          %s688 = scalar_lea.sflag [#allocation10], %s687
          %s689 = sand.u32 %s158, 1
          %s690 = smul.addr %s689, 32
          %s691 = scalar_lea.vmem [#allocation9], %s690
          %693 = dma.done %s688, 512
        $region68: #{tpu_custom_call.1} parent=59 // pred_fallthru
          _
      $region60: #{tpu_custom_call.1} parent=5 // pred_fallthru
        _
    $region6: #{tpu_custom_call.1} parent=1 // loop_footer
      %s28 = sadd.s32 1, %s24
    $region7: #{tpu_custom_call.1} parent=1 // loop_footer_branch
      %23 = sbr.rel target = $region3
    $region8: #{tpu_custom_call.1} parent=1 // loop_exit
      _
    %694 = vsyncpa [#allocation3], 1
    %s695 = scalar_lea.sflag [#allocation3], 1
    %696 = vsyncpa %s695, 1
    %697 = vsyncpa [#allocation6], 1
    %s698 = scalar_lea.sflag [#allocation6], 1
    %699 = vsyncpa %s698, 1
    %700 = vsyncpa [#allocation4], 1
    %s701 = scalar_lea.sflag [#allocation4], 1
    %702 = vsyncpa %s701, 1
    %703 = vsyncpa [#allocation10], 1
    %s704 = scalar_lea.sflag [#allocation10], 1
    %705 = vsyncpa %s704, 1

</llo_original>
